<compile_context>
chip_gen: v7x
topology: tpu7x:2x2x1
jax: 0.10.0
libtpu: 0.0.40
codegen_flags: <defaults>
</compile_context>

<pallas_src>
import math

import jax
import jax.numpy as jnp
from jax.experimental import pallas as pl
from jax.experimental.pallas import tpu as pltpu

_MIB = 1024 * 1024


def _interp_matrix(in_size: int, out_size: int, align_corners: bool) -> jnp.ndarray:
    """1-D linear interpolation weight matrix matching PyTorch semantics (f32)."""
    i = jnp.arange(out_size, dtype=jnp.float32)
    if align_corners and out_size > 1:
        src = i * (in_size - 1) / (out_size - 1)
    else:
        # Half-pixel centers clamped to >= 0 (PyTorch area_pixel_compute_source_index).
        src = (i + 0.5) * (in_size / out_size) - 0.5
        src = jnp.maximum(src, 0.0)
    i0 = jnp.clip(jnp.floor(src).astype(jnp.int32), 0, in_size - 1)
    i1 = jnp.minimum(i0 + 1, in_size - 1)
    lam = src - i0.astype(jnp.float32)
    w = jnp.zeros((out_size, in_size), jnp.float32)
    rows = jnp.arange(out_size)
    w = w.at[rows, i0].add(1.0 - lam)
    w = w.at[rows, i1].add(lam)
    return w


def _interp_kernel(x_ref, wh_ref, wwt_ref, o_ref):
    # x_ref  : (TC*H_in, W_in)   folded input slab (flattened in the wrapper)
    # wh_ref : (H_out, H_in)     f32 row-interpolation weights
    # wwt_ref: (W_in, W_out)     column weights (pre-transposed), input dtype
    # o_ref  : (TC, H_out, W_out)
    tc, h_out, w_out = o_ref.shape
    h_in = wh_ref.shape[1]

    # W interpolation: one big MXU matmul over the folded (TC*H_in) rows,
    # operands in the input dtype, accumulation in f32.
    tmp = jnp.dot(x_ref[...], wwt_ref[...],
                  preferred_element_type=jnp.float32)          # (TC*H_in, W_out) f32

    # Split the folded rows back into planes.  Pure layout no-op when
    # H_in % 8 == 0 (f32 sublane packing) — which tc selection keeps true for
    # typical feature maps — otherwise a small on-chip copy accounted for in
    # the VMEM budget.
    tmp = tmp.reshape(tc, h_in, w_out)

    # H interpolation: one batched MXU contraction over all TC planes
    # (replaces the unrolled per-plane loop -> bounded live ranges).
    # Kept in f32 end-to-end so bf16 inputs are not double-rounded; the extra
    # f32 MXU passes are hidden under the HBM-bound DMA.
    wh_b = jnp.broadcast_to(wh_ref[...], (tc, h_out, h_in))
    y = jnp.einsum("coh,chw->cow", wh_b, tmp,
                   preferred_element_type=jnp.float32)         # (TC, H_out, W_out) f32

    o_ref[...] = y.astype(o_ref.dtype)


def _tpu_tuning():
    """Per-generation (vmem_limit_bytes, tile_budget_bytes, multicore_grid)."""
    kind = ""
    try:
        dev = jax.devices()[0]
        if getattr(dev, "platform", "") == "tpu":
            kind = (getattr(dev, "device_kind", "") or "").lower()
    except Exception:
        pass
    vmem_cap = None
    try:
        vmem_cap = int(pltpu.get_tpu_info().vmem_capacity_bytes)
    except Exception:
        vmem_cap = None

    is_v7 = ("v7" in kind) or ("7x" in kind)
    if vmem_cap is None:
        # v5e/v6e have 128 MiB physical VMEM, v7x 64 MiB; be conservative when
        # the generation cannot be identified.
        vmem_cap = 64 * _MIB if (is_v7 or not kind) else 128 * _MIB

    if is_v7 or vmem_cap <= 64 * _MIB:
        # v7x: 64 MiB per TensorCore, 2 TensorCores share the parallel grid axis.
        limit = max(16 * _MIB, min(48 * _MIB, vmem_cap - 8 * _MIB))
        return limit, 20 * _MIB, True
    # v5e / v6e: single TensorCore, 128 MiB physical -> spend VMEM on big tiles,
    # don't halve the tile for a megacore that isn't there.
    return 96 * _MIB, 40 * _MIB, False


def interpolate_bilinear(x: jnp.ndarray, scale_factor: float = 2.0,
                         align_corners: bool = False) -> jnp.ndarray:
    """Pallas equivalent of F.interpolate(x, scale_factor, mode='bilinear')."""
    n, c, h_in, w_in = x.shape
    # PyTorch output size: floor(in * scale).  Exact for scale_factor=2; can be
    # off-by-one vs PyTorch only for non-representable scales (e.g. 1/3).
    h_out = int(math.floor(h_in * float(scale_factor)))
    w_out = int(math.floor(w_in * float(scale_factor)))

    # Keep MXU operands in the input dtype (bf16 stays bf16); accumulate in f32.
    cdtype = x.dtype if x.dtype in (jnp.bfloat16, jnp.float32) else jnp.float32
    wh = _interp_matrix(h_in, h_out, align_corners)                      # (H_out, H_in) f32
    ww_t = _interp_matrix(w_in, w_out, align_corners).T.astype(cdtype)   # (W_in, W_out)

    nc = n * c
    # Free contiguous reshape in the wrapper: the kernel never reshapes its
    # input block (review fix #1).
    x_flat = x.astype(cdtype).reshape(nc * h_in, w_in)

    vmem_limit, tile_budget, multicore = _tpu_tuning()

    esz = jnp.dtype(cdtype).itemsize
    osz = jnp.dtype(x.dtype).itemsize
    # Per-plane VMEM cost including the f32 intermediates and the broadcast Wh
    # (review concern: budget the hidden intermediates, not just the blocks).
    per_plane = (2 * h_in * w_in * esz        # input block (double-buffered)
                 + 2 * h_out * w_out * osz    # output block (double-buffered)
                 + h_in * w_out * 4           # f32 W-interp intermediate
                 + h_out * w_out * 4          # f32 result before the final cast
                 + h_out * h_in * 4)          # broadcast Wh slice
    resident = h_out * h_in * 4 + w_in * w_out * esz    # weight operands
    budget = max(tile_budget - resident, per_plane)

    tc_cap = max(1, min(nc, budget // per_plane))
    if multicore and nc >= 2:
        tc_cap = min(tc_cap, nc // 2)        # >= 2 grid steps so both cores work

    sublane = 8 * (4 // esz)                 # 8 rows (f32) / 16 rows (bf16)

    def _valid(t):
        if nc % t:
            return False
        # Keep the folded input block sublane-aligned unless it spans the
        # whole array (BlockSpec (8,128) rule on the second-minor dim).
        if (t * h_in) % sublane and t != nc:
            return False
        return True

    cands = [t for t in range(1, tc_cap + 1) if _valid(t)]
    if not cands:                             # pathological H_in: use one full block
        cands = [t for t in range(1, nc + 1) if _valid(t)]
    if multicore:
        even = [t for t in cands if nc // t == 1 or (nc // t) % 2 == 0]
        if even:                              # even grid -> no tail imbalance on v7x
            cands = even
    tc = max(cands)

    out3 = pl.pallas_call(
        _interp_kernel,
        out_shape=jax.ShapeDtypeStruct((nc, h_out, w_out), x.dtype),
        grid_spec=pltpu.PrefetchScalarGridSpec(
            num_scalar_prefetch=0,
            grid=(nc // tc,),
            in_specs=[
                pl.BlockSpec((tc * h_in, w_in), lambda i: (i, 0)),
                pl.BlockSpec((h_out, h_in), lambda i: (0, 0)),
                pl.BlockSpec((w_in, w_out), lambda i: (0, 0)),
            ],
            out_specs=pl.BlockSpec((tc, h_out, w_out), lambda i: (i, 0, 0)),
        ),
        compiler_params=pltpu.CompilerParams(
            dimension_semantics=("parallel",),
            vmem_limit_bytes=int(vmem_limit),
        ),
    )(x_flat, wh, ww_t)

    return out3.reshape(n, c, h_out, w_out)


class Interpolate:
    """Pallas counterpart of the PyTorch Interpolate module (vgg_models.py)."""

    def __init__(self, scale_factor, mode, align_corners=False):
        # TODO(synk): only 'bilinear' (the mode used by vgg_models.py) is implemented.
        if mode != "bilinear":
            raise NotImplementedError(f"mode={mode!r} not implemented")
        self.scale_factor = scale_factor
        self.mode = mode
        self.align_corners = align_corners

    def __call__(self, x):
        return interpolate_bilinear(x, self.scale_factor, self.align_corners)


if __name__ == "__main__":
    # vgg_models.py constructs Interpolate(scale_factor=2, mode="bilinear").
    interp = Interpolate(scale_factor=2, mode="bilinear", align_corners=False)

    key = jax.random.PRNGKey(0)
    x = jax.random.normal(key, (2, 4, 16, 16), dtype=jnp.float32)

    y = interp(x)
    jax.block_until_ready(y)
    assert y.shape == (2, 4, 32, 32), y.shape
    assert y.dtype == x.dtype

    # For 2x upsampling, jax.image.resize('bilinear') uses the same half-pixel
    # convention (with edge renormalization) as PyTorch align_corners=False.
    ref = jax.image.resize(x, (2, 4, 32, 32), method="bilinear")
    err = float(jnp.max(jnp.abs(y - ref)))
    assert err < 1e-4, err

    # bf16 path: bf16 operands on the MXU for the W-matmul, f32 accumulation
    # end-to-end through the H-matmul (no double rounding).
    xb = x.astype(jnp.bfloat16)
    yb = interp(xb)
    jax.block_until_ready(yb)
    assert yb.dtype == jnp.bfloat16
    errb = float(jnp.max(jnp.abs(yb.astype(jnp.float32) - ref)))
    assert errb < 1e-1, errb

    print("KERNEL_OK")
</pallas_src>

<mosaic_0001>
module attributes {stable_mosaic.version = 11 : i64} {
  func.func @_interp_kernel(%arg0: i32, %arg1: memref<64x16xf32, #tpu.memory_space<vmem>>, %arg2: memref<32x16xf32, #tpu.memory_space<vmem>>, %arg3: memref<16x32xf32, #tpu.memory_space<vmem>>, %arg4: memref<4x32x32xf32, #tpu.memory_space<vmem>>) attributes {dimension_semantics = [#tpu.dimension_semantics<parallel>], iteration_bounds = array<i64: 2>, scalar_prefetch = 0 : i64, scratch_operands = 0 : i64, tpu.core_type = #tpu.core_type<tc>, window_params = [{transform_indices = @transform_0, window_bounds = array<i64: 64, 16>}, {pipeline_mode = #tpu.pipeline_mode<synchronous>, transform_indices = @transform_1, window_bounds = array<i64: 32, 16>}, {pipeline_mode = #tpu.pipeline_mode<synchronous>, transform_indices = @transform_2, window_bounds = array<i64: 16, 32>}, {transform_indices = @transform_3, window_bounds = array<i64: 4, 32, 32>}]} {
    %c0 = arith.constant 0 : index
    %c0_0 = arith.constant 0 : index
    %0 = vector.load %arg1[%c0, %c0_0] : memref<64x16xf32, #tpu.memory_space<vmem>>, vector<64x16xf32>
    %c0_1 = arith.constant 0 : index
    %c0_2 = arith.constant 0 : index
    %1 = vector.load %arg3[%c0_1, %c0_2] : memref<16x32xf32, #tpu.memory_space<vmem>>, vector<16x32xf32>
    %cst = arith.constant dense<0.000000e+00> : vector<64x32xf32>
    %2 = tpu.matmul %0, %1, %cst {dimension_numbers = #tpu.dot_dimension_numbers<[1], [0], [0], [1], [0, 0, 1, 1], [], []>} : vector<64x16xf32>, vector<16x32xf32>, vector<64x32xf32> -> vector<64x32xf32>
    %3 = vector.shape_cast %2 : vector<64x32xf32> to vector<4x16x32xf32>
    %c0_3 = arith.constant 0 : index
    %c0_4 = arith.constant 0 : index
    %4 = vector.load %arg2[%c0_3, %c0_4] : memref<32x16xf32, #tpu.memory_space<vmem>>, vector<32x16xf32>
    %5 = vector.shape_cast %4 : vector<32x16xf32> to vector<1x32x16xf32>
    %6 = vector.broadcast %5 : vector<1x32x16xf32> to vector<4x32x16xf32>
    "tpu.trace_start"() <{level = 10 : i32, message = "coh,chw->cow"}> : () -> ()
    %cst_5 = arith.constant dense<0.000000e+00> : vector<4x32x32xf32>
    %7 = tpu.matmul %6, %3, %cst_5 {dimension_numbers = #tpu.dot_dimension_numbers<[2], [1], [1], [2], [0, 0, 0, 1, 1, 2], [0], [0]>} : vector<4x32x16xf32>, vector<4x16x32xf32>, vector<4x32x32xf32> -> vector<4x32x32xf32>
    "tpu.trace_stop"() : () -> ()
    %c0_6 = arith.constant 0 : index
    %c0_7 = arith.constant 0 : index
    %c0_8 = arith.constant 0 : index
    %8 = vector.load %arg4[%c0_6, %c0_7, %c0_8] : memref<4x32x32xf32, #tpu.memory_space<vmem>>, vector<4x32x32xf32>
    tpu.vector_store %arg4[%c0_6, %c0_7, %c0_8], %7 {strides = array<i32>} : memref<4x32x32xf32, #tpu.memory_space<vmem>>, vector<4x32x32xf32>,
    return
  }
  func.func @transform_0(%arg0: i32) -> (i32, i32) {
    %c0_i32 = arith.constant 0 : i32
    %c0_i32_0 = arith.constant 0 : i32
    return %arg0, %c0_i32 : i32, i32
  }
  func.func @transform_1(%arg0: i32) -> (i32, i32) {
    %c0_i32 = arith.constant 0 : i32
    %c0_i32_0 = arith.constant 0 : i32
    %c0_i32_1 = arith.constant 0 : i32
    return %c0_i32, %c0_i32_0 : i32, i32
  }
  func.func @transform_2(%arg0: i32) -> (i32, i32) {
    %c0_i32 = arith.constant 0 : i32
    %c0_i32_0 = arith.constant 0 : i32
    %c0_i32_1 = arith.constant 0 : i32
    return %c0_i32, %c0_i32_0 : i32, i32
  }
  func.func @transform_3(%arg0: i32) -> (i32, i32, i32) {
    %c0_i32 = arith.constant 0 : i32
    %c0_i32_0 = arith.constant 0 : i32
    %c0_i32_1 = arith.constant 0 : i32
    return %arg0, %c0_i32, %c0_i32_0 : i32, i32, i32
  }
}

</mosaic_0001>

<llo_original>
// kernel: tpu_custom_call.1
$region0: #{tpu_custom_call.1}
  #allocation0 [shape = 'u32[]', space=smem, size = 0x4, offset = 0x4, fixed_abs, tag = 'smem constant byte address 0x4 - core index']
  #allocation1 [shape = 'u32[144,128]{1,0:T(1,128)}', space=vmem, size = 0x12000, scoped, tag = 'internal scratch']
  %s0 = inlined_call_operand.vmem [shape: f32[128,16], index: 0, kind: input, shape index: {}]
  %s1 = inlined_call_operand.vmem [shape: f32[32,16], index: 1, kind: input, shape index: {}]
  %s2 = inlined_call_operand.vmem [shape: f32[16,32], index: 2, kind: input, shape index: {}]
  %s3 = inlined_call_operand.hbm [shape: f32[8,32,32], index: 3, kind: output, shape index: {}]
  %s4 = sld [smem:[#allocation0]]
  $region45: #{tpu_custom_call.1} parent=0
    _
  %s6 = ssub.s32 1, %s4
  %s7 = scalar_select 0, %s6, %s4
  $region1: #{tpu_custom_call.1} parent=0
    #allocation2 [shape = 'u8[131072]{0}', space=vmem, size = 0x20000, scoped, tag = 'output window, operand 0']
    #allocation3 [shape = 's32[2]{0}', space=sflag, size = 0x8, scoped, tag = 'scoped memory for tpu_custom_call.1']
    %8 = vsyncpa [#allocation3], 0
    %s9 = scalar_lea.sflag [#allocation3], 1
    %10 = vsyncpa %s9, 0
    loop: start=0, step=1, limit=4
    $region2: #{tpu_custom_call.1} parent=1 // loop_pre_header
      _
    $region3: #{tpu_custom_call.1} parent=1 // loop_header
      %s12 = sphi 0, %s16
      %p13 = scmp.ge.s32.totalorder %s12, 4
      %s22 = sphi 0, %s24
      %s25 = sphi 0, %s22
      %s26 = sphi 0, %s25
      %s42 = sphi 0, %s26
      %s46 = sphi 0, %s46
      %s48 = sphi 0, %s46
      %s49 = sphi 0, %s48
      %s63 = sphi 0, %s49
      %s67 = sphi 0, %s67
      %s69 = sphi 0, %s67
      %s70 = sphi 0, %s69
      %s84 = sphi 0, %s70
      %s90 = sphi 0, %s92
      %s93 = sphi 0, %s90
      %s94 = sphi 0, %s93
      %s110 = sphi 0, %s94
    $region4: #{tpu_custom_call.1} parent=1 // loop_header_branch
      %15 = sbr.rel (%p13) target = $region8
    $region5: #{tpu_custom_call.1} parent=1 // loop_body
      %s17 = ssub.s32 %s12, 1
      %s18 = ssub.s32 %s12, 2
      %s19 = sadd.s32 %s12, 1
      %s20 = ssub.s32 %s12, %s19
      %p21 = scmp.eq.s32.totalorder %s20, 0
      %s23 = sadd.s32 %s22, 1
      %s24 = scalar_select %p21, %s22, %s23
      %p27 = pneg %p21
      %p28 = scmp.eq.s32.totalorder %s12, 1
      %p29 = por %p27, %p28
      %p30 = scmp.ne.s32.totalorder %s22, %s25
      %p31 = scmp.eq.s32.totalorder %s12, 0
      %p32 = por %p30, %p31
      %p33 = scmp.ne.s32.totalorder %s22, %s25
      %p34 = scmp.eq.s32.totalorder %s17, 1
      %p35 = por %p33, %p34
      %p36 = scmp.ne.s32.totalorder %s25, %s26
      %p37 = scmp.eq.s32.totalorder %s17, 0
      %p38 = por %p36, %p37
      %p39 = scmp.ne.s32.totalorder %s25, %s26
      %p40 = scmp.eq.s32.totalorder %s18, 1
      %p41 = por %p39, %p40
      %p43 = scmp.ne.s32.totalorder %s26, %s42
      %p44 = scmp.eq.s32.totalorder %s18, 0
      %p45 = por %p43, %p44
      %s47 = sadd.s32 %s46, 1
      %p50 = scmp.eq.s32.totalorder %s12, 1
      %p51 = scmp.ne.s32.totalorder %s46, %s48
      %p52 = scmp.eq.s32.totalorder %s12, 0
      %p53 = por %p51, %p52
      %p54 = scmp.ne.s32.totalorder %s46, %s48
      %p55 = scmp.eq.s32.totalorder %s17, 1
      %p56 = por %p54, %p55
      %p57 = scmp.ne.s32.totalorder %s48, %s49
      %p58 = scmp.eq.s32.totalorder %s17, 0
      %p59 = por %p57, %p58
      %p60 = scmp.ne.s32.totalorder %s48, %s49
      %p61 = scmp.eq.s32.totalorder %s18, 1
      %p62 = por %p60, %p61
      %p64 = scmp.ne.s32.totalorder %s49, %s63
      %p65 = scmp.eq.s32.totalorder %s18, 0
      %p66 = por %p64, %p65
      %s68 = sadd.s32 %s67, 1
      %p71 = scmp.eq.s32.totalorder %s12, 1
      %p72 = scmp.ne.s32.totalorder %s67, %s69
      %p73 = scmp.eq.s32.totalorder %s12, 0
      %p74 = por %p72, %p73
      %p75 = scmp.ne.s32.totalorder %s67, %s69
      %p76 = scmp.eq.s32.totalorder %s17, 1
      %p77 = por %p75, %p76
      %p78 = scmp.ne.s32.totalorder %s69, %s70
      %p79 = scmp.eq.s32.totalorder %s17, 0
      %p80 = por %p78, %p79
      %p81 = scmp.ne.s32.totalorder %s69, %s70
      %p82 = scmp.eq.s32.totalorder %s18, 1
      %p83 = por %p81, %p82
      %p85 = scmp.ne.s32.totalorder %s70, %s84
      %p86 = scmp.eq.s32.totalorder %s18, 0
      %p87 = por %p85, %p86
      %s88 = ssub.s32 %s12, %s19
      %p89 = scmp.eq.s32.totalorder %s88, 0
      %s91 = sadd.s32 %s90, 1
      %s92 = scalar_select %p89, %s90, %s91
      %p95 = pneg %p89
      %p96 = scmp.eq.s32.totalorder %s12, 1
      %p97 = por %p95, %p96
      %p98 = scmp.ne.s32.totalorder %s90, %s93
      %p99 = scmp.eq.s32.totalorder %s12, 0
      %p100 = por %p98, %p99
      %p101 = scmp.ne.s32.totalorder %s90, %s93
      %p102 = scmp.eq.s32.totalorder %s17, 1
      %p103 = por %p101, %p102
      %p104 = scmp.ne.s32.totalorder %s93, %s94
      %p105 = scmp.eq.s32.totalorder %s17, 0
      %p106 = por %p104, %p105
      %p107 = scmp.ne.s32.totalorder %s93, %s94
      %p108 = scmp.eq.s32.totalorder %s18, 1
      %p109 = por %p107, %p108
      %p111 = scmp.ne.s32.totalorder %s94, %s110
      %p112 = scmp.eq.s32.totalorder %s18, 0
      %p113 = por %p111, %p112
      %p114 = scmp.le.s32.totalorder 1, %s12
      %p115 = scmp.lt.s32.totalorder %s12, 3
      %p116 = pnand %p114, %p115
      %p117 = pneg %p116
      // Predicated region
      $region9: #{tpu_custom_call.1} parent=5 // pred_check
        _
      $region10: #{tpu_custom_call.1} parent=5 // pred_check_branch
        %119 = sbr.rel (%p116) target = $region12
      $region11: #{tpu_custom_call.1} parent=5 // pred_region
        %s120 = ssub.s32 %s12, 1
        // Predicated region
        $region13: #{tpu_custom_call.1} parent=11 // pred_check
          %p121 = pneg %p59
        $region14: #{tpu_custom_call.1} parent=11 // pred_check_branch
          %123 = sbr.rel (%p121) target = $region16
        $region15: #{tpu_custom_call.1} parent=11 // pred_region
          _
        $region16: #{tpu_custom_call.1} parent=11 // pred_fallthru
          _
        // Predicated region
        $region17: #{tpu_custom_call.1} parent=11 // pred_check
          %p124 = pneg %p80
        $region18: #{tpu_custom_call.1} parent=11 // pred_check_branch
          %126 = sbr.rel (%p124) target = $region20
        $region19: #{tpu_custom_call.1} parent=11 // pred_region
          _
        $region20: #{tpu_custom_call.1} parent=11 // pred_fallthru
          _
      $region12: #{tpu_custom_call.1} parent=5 // pred_fallthru
        _
      %p127 = scmp.lt.s32.totalorder %s12, 2
      // Predicated region
      $region21: #{tpu_custom_call.1} parent=5 // pred_check
        %p128 = pneg %p127
      $region22: #{tpu_custom_call.1} parent=5 // pred_check_branch
        %130 = sbr.rel (%p128) target = $region24
      $region23: #{tpu_custom_call.1} parent=5 // pred_region
        // Predicated region
        $region25: #{tpu_custom_call.1} parent=23 // pred_check
          %p131 = pneg %p32
        $region26: #{tpu_custom_call.1} parent=23 // pred_check_branch
          %133 = sbr.rel (%p131) target = $region28
        $region27: #{tpu_custom_call.1} parent=23 // pred_region
          %s134 = smul.u32 8, %s12
          %p135 = scmp.lt.s32.totalorder %s134, 15
          %s136 = scalar_select %p135, %s134, 15
          %s137 = smul.addr %s136, 8
          %s138 = scalar_lea.vmem %s0, %s137
          %s139 = smul.u32 8, %s12
        $region28: #{tpu_custom_call.1} parent=23 // pred_fallthru
          _
      $region24: #{tpu_custom_call.1} parent=5 // pred_fallthru
        _
      %p140 = scmp.le.s32.totalorder 1, %s12
      %p141 = scmp.lt.s32.totalorder %s12, 3
      %p142 = pnand %p140, %p141
      %p143 = pneg %p142
      // Predicated region
      $region29: #{tpu_custom_call.1} parent=5 // pred_check
        _
      $region30: #{tpu_custom_call.1} parent=5 // pred_check_branch
        %145 = sbr.rel (%p142) target = $region32
      $region31: #{tpu_custom_call.1} parent=5 // pred_region
        %s146 = ssub.s32 %s12, 1
        %s147 = smul.u32 8, %s17
        %p148 = scmp.lt.s32.totalorder %s147, 15
        %s149 = scalar_select %p148, %s147, 15
        %s150 = smul.addr %s149, 8
        %s151 = scalar_lea.vmem %s0, %s150
        %p152 = pneg %p38
        %p153 = pneg %p35
        %p154 = pneg %p59
        %p155 = pneg %p56
        %p156 = pneg %p80
        %p157 = pneg %p77
        %p158 = pneg %p106
        %p159 = pneg %p103
        %s160 = sand.u32 %s93, 1
        %s161 = scalar_lea.sflag [#allocation3], %s160
        %s162 = sand.u32 %s93, 1
        %s163 = smul.addr %s162, 128
        %s164 = scalar_lea.vmem [#allocation2], %s163
        %s165 = smul.u32 8, %s17
        %p166 = scmp.lt.s32.totalorder %s165, 15
        %s167 = scalar_select %p166, %s165, 15
        %s168 = smul.addr %s167, 8
        %s169 = scalar_lea.vmem %s0, %s168
        %s170 = smul.u32 8, %s17
        %s171 = smul.u32 4, %s17
        %v172 = vld [vmem:[%s169] sm:$0xff]
        %v173 = vld [vmem:[%s169 + $0x8] sm:$0xff]
        %v174 = vld [vmem:[%s169 + $0x10] sm:$0xff]
        %v175 = vld [vmem:[%s169 + $0x18] sm:$0xff]
        %v176 = vld [vmem:[%s169 + $0x20] sm:$0xff]
        %v177 = vld [vmem:[%s169 + $0x28] sm:$0xff]
        %v178 = vld [vmem:[%s169 + $0x30] sm:$0xff]
        %v179 = vld [vmem:[%s169 + $0x38] sm:$0xff]
        %v180 = vld [vmem:[%s2] sm:$0xff]
        %v181 = vld [vmem:[%s2 + $0x8] sm:$0xff]
        %vm182 = vcmask 130048
        %v184 = vsel %vm182, %v172, 0
        %v187 = vsel %vm182, %v173, 0
        %v190 = vsel %vm182, %v174, 0
        %v193 = vsel %vm182, %v175, 0
        %v196 = vsel %vm182, %v176, 0
        %v199 = vsel %vm182, %v177, 0
        %v202 = vsel %vm182, %v178, 0
        %v205 = vsel %vm182, %v179, 0
        %207 = vmatprep.subr.mxu0 0.0
        %208 = vmatpush1.msra.mxu0 %v180
        %209 = vmatprep.subr.mxu0 0.0
        %210 = vmatpush1.msra.mxu0 %v181
        %211 = vmatprep.subr.mxu0 0.0
        %212 = vmatpush1.msra.mxu0 0.0
        %213 = vmatprep.subr.mxu0 0.0
        %214 = vmatpush1.msra.mxu0 0.0
        %215 = vmatprep.subr.mxu0 0.0
        %216 = vmatpush1.msra.mxu0 0.0
        %217 = vmatprep.subr.mxu0 0.0
        %218 = vmatpush1.msra.mxu0 0.0
        %219 = vmatprep.subr.mxu0 0.0
        %220 = vmatpush1.msra.mxu0 0.0
        %221 = vmatprep.subr.mxu0 0.0
        %222 = vmatpush1.msra.mxu0 0.0
        %223 = vmatprep.subr.mxu0 0.0
        %224 = vmatpush1.msra.mxu0 0.0
        %225 = vmatprep.subr.mxu0 0.0
        %226 = vmatpush1.msra.mxu0 0.0
        %227 = vmatprep.subr.mxu0 0.0
        %228 = vmatpush1.msra.mxu0 0.0
        %229 = vmatprep.subr.mxu0 0.0
        %230 = vmatpush1.msra.mxu0 0.0
        %231 = vmatprep.subr.mxu0 0.0
        %232 = vmatpush1.msra.mxu0 0.0
        %233 = vmatprep.subr.mxu0 0.0
        %234 = vmatpush1.msra.mxu0 0.0
        %235 = vmatprep.subr.mxu0 0.0
        %236 = vmatpush1.msra.mxu0 0.0
        %237 = vmatprep.subr.mxu0 0.0
        %238 = vmatpush1.msra.mxu0 0.0
        %239 = vmatprep.subr.mxu0 0.0
        %240 = vmatpush1.msra.mxu0 0.0
        %241 = vmatprep.subr.mxu0 0.0
        %242 = vmatpush1.msra.mxu0 0.0
        %243 = vmatprep.subr.mxu0 0.0
        %244 = vmatpush1.msra.mxu0 0.0
        %245 = vmatprep.subr.mxu0 0.0
        %246 = vmatpush1.msra.mxu0 0.0
        %247 = vmatprep.subr.mxu0 0.0
        %248 = vmatpush1.msra.mxu0 0.0
        %249 = vmatprep.subr.mxu0 0.0
        %250 = vmatpush1.msra.mxu0 0.0
        %251 = vmatprep.subr.mxu0 0.0
        %252 = vmatpush1.msra.mxu0 0.0
        %253 = vmatprep.subr.mxu0 0.0
        %254 = vmatpush1.msra.mxu0 0.0
        %255 = vmatprep.subr.mxu0 0.0
        %256 = vmatpush1.msra.mxu0 0.0
        %257 = vmatprep.subr.mxu0 0.0
        %258 = vmatpush1.msra.mxu0 0.0
        %259 = vmatprep.subr.mxu0 0.0
        %260 = vmatpush1.msra.mxu0 0.0
        %261 = vmatprep.subr.mxu0 0.0
        %262 = vmatpush1.msra.mxu0 0.0
        %263 = vmatprep.subr.mxu0 0.0
        %264 = vmatpush1.msra.mxu0 0.0
        %265 = vmatprep.subr.mxu0 0.0
        %266 = vmatpush1.msra.mxu0 0.0
        %267 = vmatprep.subr.mxu0 0.0
        %268 = vmatpush1.msra.mxu0 0.0
        %269 = vmatprep.subr.mxu0 0.0
        %270 = vmatpush1.msra.mxu0 0.0
        %271 = vmatprep.mubr.f32.mxu0 0.0
        %272 = vmatmul.mubr.f32.gmra.mrb[0].mxu0 %v184
        %v273 = vpop.f32.mrb[0].mxu0
        %v274 = vadd.f32 0.0, %v273
        %v275 = vpop.f32.mrb[0].mxu0
        %276 = vmatprep.mubr.f32.mxu0 0.0
        %277 = vmatmul.mubr.f32.gmra.mrb[0].mxu0 %v187
        %v278 = vpop.f32.mrb[0].mxu0
        %v279 = vadd.f32 0.0, %v278
        %v280 = vpop.f32.mrb[0].mxu0
        %281 = vmatprep.mubr.f32.mxu0 0.0
        %282 = vmatmul.mubr.f32.gmra.mrb[0].mxu0 %v190
        %v283 = vpop.f32.mrb[0].mxu0
        %v284 = vadd.f32 0.0, %v283
        %v285 = vpop.f32.mrb[0].mxu0
        %286 = vmatprep.mubr.f32.mxu0 0.0
        %287 = vmatmul.mubr.f32.gmra.mrb[0].mxu0 %v193
        %v288 = vpop.f32.mrb[0].mxu0
        %v289 = vadd.f32 0.0, %v288
        %v290 = vpop.f32.mrb[0].mxu0
        %291 = vmatprep.mubr.f32.mxu0 0.0
        %292 = vmatmul.mubr.f32.gmra.mrb[0].mxu0 %v196
        %v293 = vpop.f32.mrb[0].mxu0
        %v294 = vadd.f32 0.0, %v293
        %v295 = vpop.f32.mrb[0].mxu0
        %296 = vmatprep.mubr.f32.mxu0 0.0
        %297 = vmatmul.mubr.f32.gmra.mrb[0].mxu0 %v199
        %v298 = vpop.f32.mrb[0].mxu0
        %v299 = vadd.f32 0.0, %v298
        %v300 = vpop.f32.mrb[0].mxu0
        %301 = vmatprep.mubr.f32.mxu0 0.0
        %302 = vmatmul.mubr.f32.gmra.mrb[0].mxu0 %v202
        %v303 = vpop.f32.mrb[0].mxu0
        %v304 = vadd.f32 0.0, %v303
        %v305 = vpop.f32.mrb[0].mxu0
        %306 = vmatprep.mubr.f32.mxu0 0.0
        %307 = vmatmul.mubr.f32.gmra.mrb[0].mxu0 %v205
        %v308 = vpop.f32.mrb[0].mxu0
        %v309 = vadd.f32 0.0, %v308
        %v310 = vpop.f32.mrb[0].mxu0
        %311 = vdwg.mxu0
        %v312 = vld [vmem:[%s1] sm:$0xff]
        %v313 = vld [vmem:[%s1 + $0x8] sm:$0xff]
        %v314 = vld [vmem:[%s1 + $0x10] sm:$0xff]
        %v315 = vld [vmem:[%s1 + $0x18] sm:$0xff]
        %v317 = vsel %vm182, %v312, 0
        %v320 = vsel %vm182, %v313, 0
        %v323 = vsel %vm182, %v314, 0
        %v326 = vsel %vm182, %v315, 0
        %328 = vmatprep.subr.mxu0 0.0
        %329 = vmatpush1.msra.mxu0 %v274
        %330 = vmatprep.subr.mxu0 0.0
        %331 = vmatpush1.msra.mxu0 %v279
        %332 = vmatprep.subr.mxu0 0.0
        %333 = vmatpush1.msra.mxu0 0.0
        %334 = vmatprep.subr.mxu0 0.0
        %335 = vmatpush1.msra.mxu0 0.0
        %336 = vmatprep.subr.mxu0 0.0
        %337 = vmatpush1.msra.mxu0 0.0
        %338 = vmatprep.subr.mxu0 0.0
        %339 = vmatpush1.msra.mxu0 0.0
        %340 = vmatprep.subr.mxu0 0.0
        %341 = vmatpush1.msra.mxu0 0.0
        %342 = vmatprep.subr.mxu0 0.0
        %343 = vmatpush1.msra.mxu0 0.0
        %344 = vmatprep.subr.mxu0 0.0
        %345 = vmatpush1.msra.mxu0 0.0
        %346 = vmatprep.subr.mxu0 0.0
        %347 = vmatpush1.msra.mxu0 0.0
        %348 = vmatprep.subr.mxu0 0.0
        %349 = vmatpush1.msra.mxu0 0.0
        %350 = vmatprep.subr.mxu0 0.0
        %351 = vmatpush1.msra.mxu0 0.0
        %352 = vmatprep.subr.mxu0 0.0
        %353 = vmatpush1.msra.mxu0 0.0
        %354 = vmatprep.subr.mxu0 0.0
        %355 = vmatpush1.msra.mxu0 0.0
        %356 = vmatprep.subr.mxu0 0.0
        %357 = vmatpush1.msra.mxu0 0.0
        %358 = vmatprep.subr.mxu0 0.0
        %359 = vmatpush1.msra.mxu0 0.0
        %360 = vmatprep.subr.mxu0 0.0
        %361 = vmatpush1.msra.mxu0 0.0
        %362 = vmatprep.subr.mxu0 0.0
        %363 = vmatpush1.msra.mxu0 0.0
        %364 = vmatprep.subr.mxu0 0.0
        %365 = vmatpush1.msra.mxu0 0.0
        %366 = vmatprep.subr.mxu0 0.0
        %367 = vmatpush1.msra.mxu0 0.0
        %368 = vmatprep.subr.mxu0 0.0
        %369 = vmatpush1.msra.mxu0 0.0
        %370 = vmatprep.subr.mxu0 0.0
        %371 = vmatpush1.msra.mxu0 0.0
        %372 = vmatprep.subr.mxu0 0.0
        %373 = vmatpush1.msra.mxu0 0.0
        %374 = vmatprep.subr.mxu0 0.0
        %375 = vmatpush1.msra.mxu0 0.0
        %376 = vmatprep.subr.mxu0 0.0
        %377 = vmatpush1.msra.mxu0 0.0
        %378 = vmatprep.subr.mxu0 0.0
        %379 = vmatpush1.msra.mxu0 0.0
        %380 = vmatprep.subr.mxu0 0.0
        %381 = vmatpush1.msra.mxu0 0.0
        %382 = vmatprep.subr.mxu0 0.0
        %383 = vmatpush1.msra.mxu0 0.0
        %384 = vmatprep.subr.mxu0 0.0
        %385 = vmatpush1.msra.mxu0 0.0
        %386 = vmatprep.subr.mxu0 0.0
        %387 = vmatpush1.msra.mxu0 0.0
        %388 = vmatprep.subr.mxu0 0.0
        %389 = vmatpush1.msra.mxu0 0.0
        %390 = vmatprep.subr.mxu0 0.0
        %391 = vmatpush1.msra.mxu0 0.0
        %392 = vmatprep.mubr.f32.mxu0 0.0
        %393 = vmatmul.mubr.f32.gmra.mrb[0].mxu0 %v317
        %v394 = vpop.f32.mrb[0].mxu0
        %v395 = vadd.f32 0.0, %v394
        %v396 = vpop.f32.mrb[0].mxu0
        %397 = vmatprep.mubr.f32.mxu0 0.0
        %398 = vmatmul.mubr.f32.gmra.mrb[0].mxu0 %v320
        %v399 = vpop.f32.mrb[0].mxu0
        %v400 = vadd.f32 0.0, %v399
        %v401 = vpop.f32.mrb[0].mxu0
        %402 = vmatprep.mubr.f32.mxu0 0.0
        %403 = vmatmul.mubr.f32.gmra.mrb[0].mxu0 %v323
        %v404 = vpop.f32.mrb[0].mxu0
        %v405 = vadd.f32 0.0, %v404
        %v406 = vpop.f32.mrb[0].mxu0
        %407 = vmatprep.mubr.f32.mxu0 0.0
        %408 = vmatmul.mubr.f32.gmra.mrb[0].mxu0 %v326
        %v409 = vpop.f32.mrb[0].mxu0
        %v410 = vadd.f32 0.0, %v409
        %v411 = vpop.f32.mrb[0].mxu0
        %412 = vdwg.mxu0
        %413 = vmatprep.subr.mxu0 0.0
        %414 = vmatpush1.msra.mxu0 %v284
        %415 = vmatprep.subr.mxu0 0.0
        %416 = vmatpush1.msra.mxu0 %v289
        %417 = vmatprep.subr.mxu0 0.0
        %418 = vmatpush1.msra.mxu0 0.0
        %419 = vmatprep.subr.mxu0 0.0
        %420 = vmatpush1.msra.mxu0 0.0
        %421 = vmatprep.subr.mxu0 0.0
        %422 = vmatpush1.msra.mxu0 0.0
        %423 = vmatprep.subr.mxu0 0.0
        %424 = vmatpush1.msra.mxu0 0.0
        %425 = vmatprep.subr.mxu0 0.0
        %426 = vmatpush1.msra.mxu0 0.0
        %427 = vmatprep.subr.mxu0 0.0
        %428 = vmatpush1.msra.mxu0 0.0
        %429 = vmatprep.subr.mxu0 0.0
        %430 = vmatpush1.msra.mxu0 0.0
        %431 = vmatprep.subr.mxu0 0.0
        %432 = vmatpush1.msra.mxu0 0.0
        %433 = vmatprep.subr.mxu0 0.0
        %434 = vmatpush1.msra.mxu0 0.0
        %435 = vmatprep.subr.mxu0 0.0
        %436 = vmatpush1.msra.mxu0 0.0
        %437 = vmatprep.subr.mxu0 0.0
        %438 = vmatpush1.msra.mxu0 0.0
        %439 = vmatprep.subr.mxu0 0.0
        %440 = vmatpush1.msra.mxu0 0.0
        %441 = vmatprep.subr.mxu0 0.0
        %442 = vmatpush1.msra.mxu0 0.0
        %443 = vmatprep.subr.mxu0 0.0
        %444 = vmatpush1.msra.mxu0 0.0
        %445 = vmatprep.subr.mxu0 0.0
        %446 = vmatpush1.msra.mxu0 0.0
        %447 = vmatprep.subr.mxu0 0.0
        %448 = vmatpush1.msra.mxu0 0.0
        %449 = vmatprep.subr.mxu0 0.0
        %450 = vmatpush1.msra.mxu0 0.0
        %451 = vmatprep.subr.mxu0 0.0
        %452 = vmatpush1.msra.mxu0 0.0
        %453 = vmatprep.subr.mxu0 0.0
        %454 = vmatpush1.msra.mxu0 0.0
        %455 = vmatprep.subr.mxu0 0.0
        %456 = vmatpush1.msra.mxu0 0.0
        %457 = vmatprep.subr.mxu0 0.0
        %458 = vmatpush1.msra.mxu0 0.0
        %459 = vmatprep.subr.mxu0 0.0
        %460 = vmatpush1.msra.mxu0 0.0
        %461 = vmatprep.subr.mxu0 0.0
        %462 = vmatpush1.msra.mxu0 0.0
        %463 = vmatprep.subr.mxu0 0.0
        %464 = vmatpush1.msra.mxu0 0.0
        %465 = vmatprep.subr.mxu0 0.0
        %466 = vmatpush1.msra.mxu0 0.0
        %467 = vmatprep.subr.mxu0 0.0
        %468 = vmatpush1.msra.mxu0 0.0
        %469 = vmatprep.subr.mxu0 0.0
        %470 = vmatpush1.msra.mxu0 0.0
        %471 = vmatprep.subr.mxu0 0.0
        %472 = vmatpush1.msra.mxu0 0.0
        %473 = vmatprep.subr.mxu0 0.0
        %474 = vmatpush1.msra.mxu0 0.0
        %475 = vmatprep.subr.mxu0 0.0
        %476 = vmatpush1.msra.mxu0 0.0
        %477 = vmatprep.mubr.f32.mxu0 0.0
        %478 = vmatmul.mubr.f32.gmra.mrb[0].mxu0 %v317
        %v479 = vpop.f32.mrb[0].mxu0
        %v480 = vadd.f32 0.0, %v479
        %v481 = vpop.f32.mrb[0].mxu0
        %482 = vmatprep.mubr.f32.mxu0 0.0
        %483 = vmatmul.mubr.f32.gmra.mrb[0].mxu0 %v320
        %v484 = vpop.f32.mrb[0].mxu0
        %v485 = vadd.f32 0.0, %v484
        %v486 = vpop.f32.mrb[0].mxu0
        %487 = vmatprep.mubr.f32.mxu0 0.0
        %488 = vmatmul.mubr.f32.gmra.mrb[0].mxu0 %v323
        %v489 = vpop.f32.mrb[0].mxu0
        %v490 = vadd.f32 0.0, %v489
        %v491 = vpop.f32.mrb[0].mxu0
        %492 = vmatprep.mubr.f32.mxu0 0.0
        %493 = vmatmul.mubr.f32.gmra.mrb[0].mxu0 %v326
        %v494 = vpop.f32.mrb[0].mxu0
        %v495 = vadd.f32 0.0, %v494
        %v496 = vpop.f32.mrb[0].mxu0
        %497 = vdwg.mxu0
        %498 = vmatprep.subr.mxu0 0.0
        %499 = vmatpush1.msra.mxu0 %v294
        %500 = vmatprep.subr.mxu0 0.0
        %501 = vmatpush1.msra.mxu0 %v299
        %502 = vmatprep.subr.mxu0 0.0
        %503 = vmatpush1.msra.mxu0 0.0
        %504 = vmatprep.subr.mxu0 0.0
        %505 = vmatpush1.msra.mxu0 0.0
        %506 = vmatprep.subr.mxu0 0.0
        %507 = vmatpush1.msra.mxu0 0.0
        %508 = vmatprep.subr.mxu0 0.0
        %509 = vmatpush1.msra.mxu0 0.0
        %510 = vmatprep.subr.mxu0 0.0
        %511 = vmatpush1.msra.mxu0 0.0
        %512 = vmatprep.subr.mxu0 0.0
        %513 = vmatpush1.msra.mxu0 0.0
        %514 = vmatprep.subr.mxu0 0.0
        %515 = vmatpush1.msra.mxu0 0.0
        %516 = vmatprep.subr.mxu0 0.0
        %517 = vmatpush1.msra.mxu0 0.0
        %518 = vmatprep.subr.mxu0 0.0
        %519 = vmatpush1.msra.mxu0 0.0
        %520 = vmatprep.subr.mxu0 0.0
        %521 = vmatpush1.msra.mxu0 0.0
        %522 = vmatprep.subr.mxu0 0.0
        %523 = vmatpush1.msra.mxu0 0.0
        %524 = vmatprep.subr.mxu0 0.0
        %525 = vmatpush1.msra.mxu0 0.0
        %526 = vmatprep.subr.mxu0 0.0
        %527 = vmatpush1.msra.mxu0 0.0
        %528 = vmatprep.subr.mxu0 0.0
        %529 = vmatpush1.msra.mxu0 0.0
        %530 = vmatprep.subr.mxu0 0.0
        %531 = vmatpush1.msra.mxu0 0.0
        %532 = vmatprep.subr.mxu0 0.0
        %533 = vmatpush1.msra.mxu0 0.0
        %534 = vmatprep.subr.mxu0 0.0
        %535 = vmatpush1.msra.mxu0 0.0
        %536 = vmatprep.subr.mxu0 0.0
        %537 = vmatpush1.msra.mxu0 0.0
        %538 = vmatprep.subr.mxu0 0.0
        %539 = vmatpush1.msra.mxu0 0.0
        %540 = vmatprep.subr.mxu0 0.0
        %541 = vmatpush1.msra.mxu0 0.0
        %542 = vmatprep.subr.mxu0 0.0
        %543 = vmatpush1.msra.mxu0 0.0
        %544 = vmatprep.subr.mxu0 0.0
        %545 = vmatpush1.msra.mxu0 0.0
        %546 = vmatprep.subr.mxu0 0.0
        %547 = vmatpush1.msra.mxu0 0.0
        %548 = vmatprep.subr.mxu0 0.0
        %549 = vmatpush1.msra.mxu0 0.0
        %550 = vmatprep.subr.mxu0 0.0
        %551 = vmatpush1.msra.mxu0 0.0
        %552 = vmatprep.subr.mxu0 0.0
        %553 = vmatpush1.msra.mxu0 0.0
        %554 = vmatprep.subr.mxu0 0.0
        %555 = vmatpush1.msra.mxu0 0.0
        %556 = vmatprep.subr.mxu0 0.0
        %557 = vmatpush1.msra.mxu0 0.0
        %558 = vmatprep.subr.mxu0 0.0
        %559 = vmatpush1.msra.mxu0 0.0
        %560 = vmatprep.subr.mxu0 0.0
        %561 = vmatpush1.msra.mxu0 0.0
        %562 = vmatprep.mubr.f32.mxu0 0.0
        %563 = vmatmul.mubr.f32.gmra.mrb[0].mxu0 %v317
        %v564 = vpop.f32.mrb[0].mxu0
        %v565 = vadd.f32 0.0, %v564
        %v566 = vpop.f32.mrb[0].mxu0
        %567 = vmatprep.mubr.f32.mxu0 0.0
        %568 = vmatmul.mubr.f32.gmra.mrb[0].mxu0 %v320
        %v569 = vpop.f32.mrb[0].mxu0
        %v570 = vadd.f32 0.0, %v569
        %v571 = vpop.f32.mrb[0].mxu0
        %572 = vmatprep.mubr.f32.mxu0 0.0
        %573 = vmatmul.mubr.f32.gmra.mrb[0].mxu0 %v323
        %v574 = vpop.f32.mrb[0].mxu0
        %v575 = vadd.f32 0.0, %v574
        %v576 = vpop.f32.mrb[0].mxu0
        %577 = vmatprep.mubr.f32.mxu0 0.0
        %578 = vmatmul.mubr.f32.gmra.mrb[0].mxu0 %v326
        %v579 = vpop.f32.mrb[0].mxu0
        %v580 = vadd.f32 0.0, %v579
        %v581 = vpop.f32.mrb[0].mxu0
        %582 = vdwg.mxu0
        %583 = vmatprep.subr.mxu0 0.0
        %584 = vmatpush1.msra.mxu0 %v304
        %585 = vmatprep.subr.mxu0 0.0
        %586 = vmatpush1.msra.mxu0 %v309
        %587 = vmatprep.subr.mxu0 0.0
        %588 = vmatpush1.msra.mxu0 0.0
        %589 = vmatprep.subr.mxu0 0.0
        %590 = vmatpush1.msra.mxu0 0.0
        %591 = vmatprep.subr.mxu0 0.0
        %592 = vmatpush1.msra.mxu0 0.0
        %593 = vmatprep.subr.mxu0 0.0
        %594 = vmatpush1.msra.mxu0 0.0
        %595 = vmatprep.subr.mxu0 0.0
        %596 = vmatpush1.msra.mxu0 0.0
        %597 = vmatprep.subr.mxu0 0.0
        %598 = vmatpush1.msra.mxu0 0.0
        %599 = vmatprep.subr.mxu0 0.0
        %600 = vmatpush1.msra.mxu0 0.0
        %601 = vmatprep.subr.mxu0 0.0
        %602 = vmatpush1.msra.mxu0 0.0
        %603 = vmatprep.subr.mxu0 0.0
        %604 = vmatpush1.msra.mxu0 0.0
        %605 = vmatprep.subr.mxu0 0.0
        %606 = vmatpush1.msra.mxu0 0.0
        %607 = vmatprep.subr.mxu0 0.0
        %608 = vmatpush1.msra.mxu0 0.0
        %609 = vmatprep.subr.mxu0 0.0
        %610 = vmatpush1.msra.mxu0 0.0
        %611 = vmatprep.subr.mxu0 0.0
        %612 = vmatpush1.msra.mxu0 0.0
        %613 = vmatprep.subr.mxu0 0.0
        %614 = vmatpush1.msra.mxu0 0.0
        %615 = vmatprep.subr.mxu0 0.0
        %616 = vmatpush1.msra.mxu0 0.0
        %617 = vmatprep.subr.mxu0 0.0
        %618 = vmatpush1.msra.mxu0 0.0
        %619 = vmatprep.subr.mxu0 0.0
        %620 = vmatpush1.msra.mxu0 0.0
        %621 = vmatprep.subr.mxu0 0.0
        %622 = vmatpush1.msra.mxu0 0.0
        %623 = vmatprep.subr.mxu0 0.0
        %624 = vmatpush1.msra.mxu0 0.0
        %625 = vmatprep.subr.mxu0 0.0
        %626 = vmatpush1.msra.mxu0 0.0
        %627 = vmatprep.subr.mxu0 0.0
        %628 = vmatpush1.msra.mxu0 0.0
        %629 = vmatprep.subr.mxu0 0.0
        %630 = vmatpush1.msra.mxu0 0.0
        %631 = vmatprep.subr.mxu0 0.0
        %632 = vmatpush1.msra.mxu0 0.0
        %633 = vmatprep.subr.mxu0 0.0
        %634 = vmatpush1.msra.mxu0 0.0
        %635 = vmatprep.subr.mxu0 0.0
        %636 = vmatpush1.msra.mxu0 0.0
        %637 = vmatprep.subr.mxu0 0.0
        %638 = vmatpush1.msra.mxu0 0.0
        %639 = vmatprep.subr.mxu0 0.0
        %640 = vmatpush1.msra.mxu0 0.0
        %641 = vmatprep.subr.mxu0 0.0
        %642 = vmatpush1.msra.mxu0 0.0
        %643 = vmatprep.subr.mxu0 0.0
        %644 = vmatpush1.msra.mxu0 0.0
        %645 = vmatprep.subr.mxu0 0.0
        %646 = vmatpush1.msra.mxu0 0.0
        %647 = vmatprep.mubr.f32.mxu0 0.0
        %648 = vmatmul.mubr.f32.gmra.mrb[0].mxu0 %v317
        %v649 = vpop.f32.mrb[0].mxu0
        %v650 = vadd.f32 0.0, %v649
        %v651 = vpop.f32.mrb[0].mxu0
        %652 = vmatprep.mubr.f32.mxu0 0.0
        %653 = vmatmul.mubr.f32.gmra.mrb[0].mxu0 %v320
        %v654 = vpop.f32.mrb[0].mxu0
        %v655 = vadd.f32 0.0, %v654
        %v656 = vpop.f32.mrb[0].mxu0
        %657 = vmatprep.mubr.f32.mxu0 0.0
        %658 = vmatmul.mubr.f32.gmra.mrb[0].mxu0 %v323
        %v659 = vpop.f32.mrb[0].mxu0
        %v660 = vadd.f32 0.0, %v659
        %v661 = vpop.f32.mrb[0].mxu0
        %662 = vmatprep.mubr.f32.mxu0 0.0
        %663 = vmatmul.mubr.f32.gmra.mrb[0].mxu0 %v326
        %v664 = vpop.f32.mrb[0].mxu0
        %v665 = vadd.f32 0.0, %v664
        %v666 = vpop.f32.mrb[0].mxu0
        %667 = vdwg.mxu0
        %vm668 = vcmask 261120
        %669 = vst.msk [vmem:[%s164] sm:$0xff] %vm668, %v395
        %670 = vst.msk [vmem:[%s164 + $0x8] sm:$0xff] %vm668, %v400
        %671 = vst.msk [vmem:[%s164 + $0x10] sm:$0xff] %vm668, %v405
        %672 = vst.msk [vmem:[%s164 + $0x18] sm:$0xff] %vm668, %v410
        %673 = vst.msk [vmem:[%s164 + $0x20] sm:$0xff] %vm668, %v480
        %674 = vst.msk [vmem:[%s164 + $0x28] sm:$0xff] %vm668, %v485
        %675 = vst.msk [vmem:[%s164 + $0x30] sm:$0xff] %vm668, %v490
        %676 = vst.msk [vmem:[%s164 + $0x38] sm:$0xff] %vm668, %v495
        %677 = vst.msk [vmem:[%s164 + $0x40] sm:$0xff] %vm668, %v565
        %678 = vst.msk [vmem:[%s164 + $0x48] sm:$0xff] %vm668, %v570
        %679 = vst.msk [vmem:[%s164 + $0x50] sm:$0xff] %vm668, %v575
        %680 = vst.msk [vmem:[%s164 + $0x58] sm:$0xff] %vm668, %v580
        %681 = vst.msk [vmem:[%s164 + $0x60] sm:$0xff] %vm668, %v650
        %682 = vst.msk [vmem:[%s164 + $0x68] sm:$0xff] %vm668, %v655
        %683 = vst.msk [vmem:[%s164 + $0x70] sm:$0xff] %vm668, %v660
        %684 = vst.msk [vmem:[%s164 + $0x78] sm:$0xff] %vm668, %v665
        %s685 = sand.u32 %s93, 1
        %s686 = scalar_lea.sflag [#allocation3], %s685
        %s687 = sand.u32 %s93, 1
        %s688 = smul.addr %s687, 128
        %s689 = scalar_lea.vmem [#allocation2], %s688
        // Predicated region
        $region33: #{tpu_custom_call.1} parent=31 // pred_check
          %p690 = pneg %p103
        $region34: #{tpu_custom_call.1} parent=31 // pred_check_branch
          %692 = sbr.rel (%p690) target = $region36
        $region35: #{tpu_custom_call.1} parent=31 // pred_region
          %s693 = smul.u32 4, %s17
          %s695 = ssub.s32 2048, 2048
          %696 = vsyncadd %s686, %s695
          %s697 = smul.addr %s693, 4
          %s698 = smul.addr %s697, 128
          %s699 = scalar_lea.hbm %s3, %s698
          %s700 = sshll.u32 %s689, 4
          %s701 = int_to_ptr.vmem [resolvable:$true] %s700
          %706 = dma.vmem_to_hbm [thread:$0]  %s701, 2048, %s699, %s686, 128, 128, 8
        $region36: #{tpu_custom_call.1} parent=31 // pred_fallthru
          _
      $region32: #{tpu_custom_call.1} parent=5 // pred_fallthru
        _
      %p707 = scmp.le.s32.totalorder 2, %s12
      // Predicated region
      $region37: #{tpu_custom_call.1} parent=5 // pred_check
        %p708 = pneg %p707
      $region38: #{tpu_custom_call.1} parent=5 // pred_check_branch
        %710 = sbr.rel (%p708) target = $region40
      $region39: #{tpu_custom_call.1} parent=5 // pred_region
        %s711 = ssub.s32 %s12, 2
        // Predicated region
        $region41: #{tpu_custom_call.1} parent=39 // pred_check
          %p712 = pneg %p109
        $region42: #{tpu_custom_call.1} parent=39 // pred_check_branch
          %714 = sbr.rel (%p712) target = $region44
        $region43: #{tpu_custom_call.1} parent=39 // pred_region
          %s715 = sand.u32 %s94, 1
          %s716 = scalar_lea.sflag [#allocation3], %s715
          %s717 = sand.u32 %s94, 1
          %s718 = smul.addr %s717, 128
          %s719 = scalar_lea.vmem [#allocation2], %s718
          %720 = dma.done %s716, 2048
        $region44: #{tpu_custom_call.1} parent=39 // pred_fallthru
          _
      $region40: #{tpu_custom_call.1} parent=5 // pred_fallthru
        _
    $region6: #{tpu_custom_call.1} parent=1 // loop_footer
      %s16 = sadd.s32 1, %s12
    $region7: #{tpu_custom_call.1} parent=1 // loop_footer_branch
      %11 = sbr.rel target = $region3
    $region8: #{tpu_custom_call.1} parent=1 // loop_exit
      _
    %721 = vsyncpa [#allocation3], 1
    %s722 = scalar_lea.sflag [#allocation3], 1
    %723 = vsyncpa %s722, 1

</llo_original>
